<compile_context>
chip_gen: v7x
topology: tpu7x:2x2x1
jax: 0.10.0
libtpu: 0.0.40
codegen_flags: <defaults>
</compile_context>

<pallas_src>
import numpy as np
import jax
import jax.numpy as jnp
from jax.experimental import pallas as pl
from jax.experimental.pallas import tpu as pltpu

_EPS = 0.1  # eps of extended_log (the module's self.eps=1e-8 is unused in 'log' mode)

_LANE_CANDIDATES = (8192, 4096, 2048, 1024, 512, 256, 128)
_TARGET_TILE_BYTES = 1 << 20      # ~1 MiB per buffer (v5e scoped-VMEM safe)
_MIN_TILE_BYTES = 512 << 10       # don't shrink tiles below ~512 KiB for step count
_MIN_STEPS = 8                    # aim for >= 8 grid steps on big inputs


def _rank_loss_kernel(pos_ref, neg_ref, out_ref):
    # Upcast to f32 for the math; write back in the I/O dtype.
    pos = pos_ref[...].astype(jnp.float32)
    neg = neg_ref[...].astype(jnp.float32)
    # sigmoid(p) - sigmoid(n) == 0.5 * (tanh(p/2) - tanh(n/2)): 1 EUP op/side.
    d = 0.5 * (jnp.tanh(0.5 * pos) - jnp.tanh(0.5 * neg))
    lin = 10.0 * d  # == d / eps  with eps = 0.1
    # log(d+eps) - log(eps) == log1p(d/eps) == log1p(10*d).
    # The max() only protects the UNTAKEN branch (d <= 0) from log1p(<= -1);
    # for d > 0 it is the identity, so forward values are unchanged.
    log_branch = jnp.log1p(jnp.maximum(lin, 0.0))
    out_ref[...] = (-jnp.where(d > 0.0, log_branch, lin)).astype(out_ref.dtype)


def _pick_lanes(n: int, sub: int):
    """Pick lane width. Returns (lanes, needs_pad)."""
    # 1) widest lane count dividing n exactly with full sublane utilization
    for cand in _LANE_CANDIDATES:
        if n % cand == 0 and n // cand >= sub:
            return cand, False
    # 2) any lane count dividing n exactly (tiny inputs)
    for cand in _LANE_CANDIDATES:
        if n % cand == 0:
            return cand, False
    # 3) fallback: widest that fits; needs a small pad up to a lanes multiple.
    # TODO(synk): handle the sub-lane tail with a tiny second kernel instead of
    # the pad + slice copies (only hit when n is not a multiple of 128).
    for cand in _LANE_CANDIDATES:
        if sub * cand <= n:
            return cand, True
    return 128, True


def rank_loss(pos: jax.Array, neg: jax.Array) -> jax.Array:
    """Elementwise rank loss (loss_type='log'). pos/neg: same shape & dtype."""
    assert pos.shape == neg.shape
    orig_shape = pos.shape
    dtype = pos.dtype
    itemsize = jnp.dtype(dtype).itemsize
    n = int(np.prod(orig_shape))

    # Minimum sublane granularity for this dtype (f32: 8, bf16: 16, int8: 32).
    sub = 8 * max(1, 4 // itemsize)

    lanes, needs_pad = _pick_lanes(n, sub)
    rows = -(-n // lanes)                 # cdiv
    padded_n = rows * lanes               # == n when no pad is needed

    # ---- tile rows ------------------------------------------------------
    bytes_per_row = lanes * itemsize

    def rows_for(nbytes):
        return max(sub, (nbytes // bytes_per_row) // sub * sub)

    tr = rows_for(_TARGET_TILE_BYTES)
    # Keep >= _MIN_STEPS grid steps (pipelining + v7x dual-TC sharding) as
    # long as the tile stays >= ~512 KiB per buffer.
    steps_cap = (rows // _MIN_STEPS) // sub * sub
    if steps_cap >= rows_for(_MIN_TILE_BYTES):
        tr = min(tr, steps_cap)
    if tr >= rows:
        tr = rows                         # single full-extent block (always legal)
    num_steps = pl.cdiv(rows, tr)         # ragged last block is masked by Pallas

    # ---- lay out the slab (no copies in the aligned case) ---------------
    pos_f = jnp.ravel(pos)
    neg_f = jnp.ravel(neg)
    if needs_pad and padded_n != n:
        pos_f = jnp.pad(pos_f, (0, padded_n - n))
        neg_f = jnp.pad(neg_f, (0, padded_n - n))
    pos2d = pos_f.reshape(rows, lanes)
    neg2d = neg_f.reshape(rows, lanes)

    out2d = pl.pallas_call(
        _rank_loss_kernel,
        out_shape=jax.ShapeDtypeStruct((rows, lanes), dtype),
        grid_spec=pltpu.PrefetchScalarGridSpec(
            num_scalar_prefetch=0,
            grid=(num_steps,),
            in_specs=[
                pl.BlockSpec((tr, lanes), lambda i: (i, 0)),
                pl.BlockSpec((tr, lanes), lambda i: (i, 0)),
            ],
            out_specs=pl.BlockSpec((tr, lanes), lambda i: (i, 0)),
        ),
        compiler_params=pltpu.CompilerParams(
            # Independent grid steps: lets Mosaic shard them across v7x's 2 TCs.
            dimension_semantics=("parallel",),
        ),
        cost_estimate=pl.CostEstimate(
            flops=8 * n,
            transcendentals=3 * n,            # 2 tanh + 1 log1p per element
            bytes_accessed=3 * n * itemsize,
        ),
    )(pos2d, neg2d)

    if padded_n == n:
        # Aligned case (common): pure reshape, no extra HBM pass.
        return out2d.reshape(orig_shape)
    return out2d.reshape(-1)[:n].reshape(orig_shape)


def _rank_loss_ref(pos, neg):
    # Faithful to the PyTorch module: -extended_log(sigmoid(pos) - sigmoid(neg)).
    d = jax.nn.sigmoid(pos) - jax.nn.sigmoid(neg)
    return -jnp.where(d > 0, jnp.log(d + _EPS) - np.log(_EPS), 10.0 * d)


if __name__ == "__main__":
    key = jax.random.PRNGKey(0)
    k1, k2 = jax.random.split(key)
    shape = (2, 4, 16, 16)
    pos = jax.random.normal(k1, shape, dtype=jnp.float32)
    neg = jax.random.normal(k2, shape, dtype=jnp.float32)

    out = rank_loss(pos, neg)
    out = jax.block_until_ready(out)

    ref = _rank_loss_ref(pos, neg)
    np.testing.assert_allclose(np.asarray(out), np.asarray(ref), rtol=1e-5, atol=1e-5)

    print("KERNEL_OK")
</pallas_src>

<mosaic_0001>
module attributes {stable_mosaic.version = 11 : i64} {
  func.func @_rank_loss_kernel(%arg0: i32, %arg1: memref<8x256xf32, #tpu.memory_space<vmem>>, %arg2: memref<8x256xf32, #tpu.memory_space<vmem>>, %arg3: memref<8x256xf32, #tpu.memory_space<vmem>>) attributes {dimension_semantics = [#tpu.dimension_semantics<parallel>], iteration_bounds = array<i64: 1>, scalar_prefetch = 0 : i64, scratch_operands = 0 : i64, tpu.core_type = #tpu.core_type<tc>, window_params = [{transform_indices = @transform_0, window_bounds = array<i64: 8, 256>}, {transform_indices = @transform_1, window_bounds = array<i64: 8, 256>}, {transform_indices = @transform_2, window_bounds = array<i64: 8, 256>}]} {
    %c0 = arith.constant 0 : index
    %c0_0 = arith.constant 0 : index
    %0 = vector.load %arg1[%c0, %c0_0] : memref<8x256xf32, #tpu.memory_space<vmem>>, vector<8x256xf32>
    %c0_1 = arith.constant 0 : index
    %c0_2 = arith.constant 0 : index
    %1 = vector.load %arg2[%c0_1, %c0_2] : memref<8x256xf32, #tpu.memory_space<vmem>>, vector<8x256xf32>
    %cst = arith.constant 5.000000e-01 : f32
    %2 = vector.broadcast %cst : f32 to vector<8x256xf32>
    %3 = arith.mulf %2, %0 : vector<8x256xf32>
    %4 = math.tanh %3 : vector<8x256xf32>
    %cst_3 = arith.constant 5.000000e-01 : f32
    %5 = vector.broadcast %cst_3 : f32 to vector<8x256xf32>
    %6 = arith.mulf %5, %1 : vector<8x256xf32>
    %7 = math.tanh %6 : vector<8x256xf32>
    %8 = arith.subf %4, %7 : vector<8x256xf32>
    %cst_4 = arith.constant 5.000000e-01 : f32
    %9 = vector.broadcast %cst_4 : f32 to vector<8x256xf32>
    %10 = arith.mulf %9, %8 : vector<8x256xf32>
    %cst_5 = arith.constant 1.000000e+01 : f32
    %11 = vector.broadcast %cst_5 : f32 to vector<8x256xf32>
    %12 = arith.mulf %11, %10 : vector<8x256xf32>
    %cst_6 = arith.constant 0.000000e+00 : f32
    %13 = vector.broadcast %cst_6 : f32 to vector<8x256xf32>
    %14 = arith.maximumf %12, %13 : vector<8x256xf32>
    %15 = math.log1p %14 : vector<8x256xf32>
    %cst_7 = arith.constant 0.000000e+00 : f32
    %16 = vector.broadcast %cst_7 : f32 to vector<8x256xf32>
    %17 = arith.cmpf ogt, %10, %16 : vector<8x256xf32>
    %18 = arith.select %17, %15, %12 : vector<8x256xi1>, vector<8x256xf32>
    %cst_8 = arith.constant 0.000000e+00 : f32
    %19 = vector.broadcast %cst_8 : f32 to vector<8x256xf32>
    %20 = arith.subf %19, %18 : vector<8x256xf32>
    %c0_9 = arith.constant 0 : index
    %c0_10 = arith.constant 0 : index
    %21 = vector.load %arg3[%c0_9, %c0_10] : memref<8x256xf32, #tpu.memory_space<vmem>>, vector<8x256xf32>
    tpu.vector_store %arg3[%c0_9, %c0_10], %20 {strides = array<i32>} : memref<8x256xf32, #tpu.memory_space<vmem>>, vector<8x256xf32>,
    return
  }
  func.func @transform_0(%arg0: i32) -> (i32, i32) {
    %c0_i32 = arith.constant 0 : i32
    %c0_i32_0 = arith.constant 0 : i32
    return %arg0, %c0_i32 : i32, i32
  }
  func.func @transform_1(%arg0: i32) -> (i32, i32) {
    %c0_i32 = arith.constant 0 : i32
    %c0_i32_0 = arith.constant 0 : i32
    return %arg0, %c0_i32 : i32, i32
  }
  func.func @transform_2(%arg0: i32) -> (i32, i32) {
    %c0_i32 = arith.constant 0 : i32
    %c0_i32_0 = arith.constant 0 : i32
    return %arg0, %c0_i32 : i32, i32
  }
}

</mosaic_0001>

<llo_original>
// kernel: tpu_custom_call.1
$region0: #{tpu_custom_call.1}
  #allocation0 [shape = 'u32[]', space=smem, size = 0x4, offset = 0x4, fixed_abs, tag = 'smem constant byte address 0x4 - core index']
  #allocation1 [shape = 'u32[144,128]{1,0:T(1,128)}', space=vmem, size = 0x12000, scoped, tag = 'internal scratch']
  %s0 = inlined_call_operand.hbm [shape: f32[8,256], index: 0, kind: input, shape index: {}]
  %s1 = inlined_call_operand.hbm [shape: f32[8,256], index: 1, kind: input, shape index: {}]
  %s2 = inlined_call_operand.hbm [shape: f32[8,256], index: 2, kind: output, shape index: {}]
  %s3 = sld [smem:[#allocation0]]
  $region26: #{tpu_custom_call.1} parent=0
    _
  %s5 = ssub.s32 1, %s3
  %s6 = scalar_select 0, %s5, %s3
  $region1: #{tpu_custom_call.1} parent=0
    #allocation2 [shape = 'u8[8192]{0}', space=vmem, size = 0x2000, scoped, tag = 'input window, operand 0, single buffered']
    #allocation3 [shape = 's32[1]{0}', space=sflag, size = 0x4, scoped, tag = 'scoped memory for tpu_custom_call.1']
    #allocation4 [shape = 's32[1]{0}', space=sflag, size = 0x4, scoped, tag = 'scoped memory for tpu_custom_call.1']
    #allocation5 [shape = 'u8[8192]{0}', space=vmem, size = 0x2000, scoped, tag = 'input window, operand 1, single buffered']
    #allocation6 [shape = 's32[1]{0}', space=sflag, size = 0x4, scoped, tag = 'scoped memory for tpu_custom_call.1']
    #allocation7 [shape = 'u8[8192]{0}', space=vmem, size = 0x2000, scoped, tag = 'output window, operand 0, single buffered']
    %7 = vsyncpa [#allocation3], 0
    %8 = vsyncpa [#allocation6], 0
    %9 = vsyncpa [#allocation4], 0
    // Predicated region
    $region2: #{tpu_custom_call.1} parent=1 // pred_check
      _
    $region3: #{tpu_custom_call.1} parent=1 // pred_check_branch
      %11 = sbr.rel (0) target = $region5
    $region4: #{tpu_custom_call.1} parent=1 // pred_region
      %s13 = ssub.s32 256, 256
      %14 = vsyncadd [#allocation3], %s13
      %s16 = sshll.u32 [#allocation2], 4
      %s17 = int_to_ptr.vmem [resolvable:$true] %s16
      %19 = dma.hbm_to_vmem [thread:$0]  %s0, 256, %s17, [#allocation3]
    $region5: #{tpu_custom_call.1} parent=1 // pred_fallthru
      _
    // Predicated region
    $region6: #{tpu_custom_call.1} parent=1 // pred_check
      _
    $region7: #{tpu_custom_call.1} parent=1 // pred_check_branch
      %21 = sbr.rel (0) target = $region9
    $region8: #{tpu_custom_call.1} parent=1 // pred_region
      %s23 = ssub.s32 256, 256
      %24 = vsyncadd [#allocation6], %s23
      %s26 = sshll.u32 [#allocation5], 4
      %s27 = int_to_ptr.vmem [resolvable:$true] %s26
      %29 = dma.hbm_to_vmem [thread:$0]  %s1, 256, %s27, [#allocation6]
    $region9: #{tpu_custom_call.1} parent=1 // pred_fallthru
      _
    // Predicated region
    $region10: #{tpu_custom_call.1} parent=1 // pred_check
      _
    $region11: #{tpu_custom_call.1} parent=1 // pred_check_branch
      %31 = sbr.rel (0) target = $region13
    $region12: #{tpu_custom_call.1} parent=1 // pred_region
      %32 = dma.done [#allocation3], 256
    $region13: #{tpu_custom_call.1} parent=1 // pred_fallthru
      _
    // Predicated region
    $region14: #{tpu_custom_call.1} parent=1 // pred_check
      _
    $region15: #{tpu_custom_call.1} parent=1 // pred_check_branch
      %34 = sbr.rel (0) target = $region17
    $region16: #{tpu_custom_call.1} parent=1 // pred_region
      %35 = dma.done [#allocation6], 256
    $region17: #{tpu_custom_call.1} parent=1 // pred_fallthru
      _
    %v36 = vld [vmem:[#allocation2] sm:$0xff]
    %v37 = vld [vmem:[#allocation2 + $0x8] sm:$0xff]
    %v38 = vld [vmem:[#allocation5] sm:$0xff]
    %v39 = vld [vmem:[#allocation5 + $0x8] sm:$0xff]
    %v40 = vmul.f32 %v36, 0.5
    %v41 = vmul.f32 %v37, 0.5
    %v42 = vtanh.pop %v40
    %v43 = vtanh.pop %v41
    %v44 = vmul.f32 %v38, 0.5
    %v45 = vmul.f32 %v39, 0.5
    %v46 = vtanh.pop %v44
    %v47 = vtanh.pop %v45
    %v48 = vsub.f32 %v42, %v46
    %v49 = vsub.f32 %v43, %v47
    %v50 = vmul.f32 %v48, 0.5
    %v51 = vmul.f32 %v49, 0.5
    %v52 = vmul.f32 %v50, 10.0
    %v53 = vmul.f32 %v51, 10.0
    %v54 = vmax.f32 %v52, 0.0
    %v55 = vmax.f32 %v53, 0.0
    %v56 = vadd.f32 %v54, 1.0
    %v57 = vlog2.pop %v56
    %v58 = vmul.f32 %v57, 0.6931472
    %v59 = vmul.f32 -0.5, %v54
    %v60 = vadd.f32 %v59, 1.0
    %v61 = vmul.f32 %v60, %v54
    %v62 = vand.u32 2147483647, %v54
    %vm63 = vcmp.lt.f32.partialorder %v62, 0.0004427343
    %v64 = vsel %vm63, %v61, %v58
    %v65 = vadd.f32 %v55, 1.0
    %v66 = vlog2.pop %v65
    %v67 = vmul.f32 %v66, 0.6931472
    %v68 = vmul.f32 -0.5, %v55
    %v69 = vadd.f32 %v68, 1.0
    %v70 = vmul.f32 %v69, %v55
    %v71 = vand.u32 2147483647, %v55
    %vm72 = vcmp.lt.f32.partialorder %v71, 0.0004427343
    %v73 = vsel %vm72, %v70, %v67
    %vm74 = vcmp.gt.f32.partialorder %v50, 0.0
    %vm75 = vcmp.gt.f32.partialorder %v51, 0.0
    %v76 = vsel %vm74, %v64, %v52
    %v77 = vsel %vm75, %v73, %v53
    %v78 = vsub.f32 0.0, %v76
    %v79 = vsub.f32 0.0, %v77
    %80 = vst [vmem:[#allocation7] sm:$0xff] %v78
    %81 = vst [vmem:[#allocation7 + $0x8] sm:$0xff] %v79
    // Predicated region
    $region18: #{tpu_custom_call.1} parent=1 // pred_check
      _
    $region19: #{tpu_custom_call.1} parent=1 // pred_check_branch
      %83 = sbr.rel (0) target = $region21
    $region20: #{tpu_custom_call.1} parent=1 // pred_region
      %s85 = ssub.s32 256, 256
      %86 = vsyncadd [#allocation4], %s85
      %s88 = sshll.u32 [#allocation7], 4
      %s89 = int_to_ptr.vmem [resolvable:$true] %s88
      %91 = dma.vmem_to_hbm [thread:$0]  %s89, 256, %s2, [#allocation4]
    $region21: #{tpu_custom_call.1} parent=1 // pred_fallthru
      _
    // Predicated region
    $region22: #{tpu_custom_call.1} parent=1 // pred_check
      _
    $region23: #{tpu_custom_call.1} parent=1 // pred_check_branch
      %93 = sbr.rel (0) target = $region25
    $region24: #{tpu_custom_call.1} parent=1 // pred_region
      %94 = dma.done [#allocation4], 256
    $region25: #{tpu_custom_call.1} parent=1 // pred_fallthru
      _
    %95 = vsyncpa [#allocation3], 1
    %96 = vsyncpa [#allocation6], 1
    %97 = vsyncpa [#allocation4], 1

</llo_original>
